<compile_context>
chip_gen: v5e
topology: v5e:2x2
jax: 0.10.0
libtpu: 0.0.40
codegen_flags: <defaults>
</compile_context>

<pallas_src>
import jax
import jax.numpy as jnp
from jax import lax
from jax.experimental import pallas as pl
from jax.experimental.pallas import tpu as pltpu


_MASK_NEG = 1e9
_LEAKY_SLOPE = 0.2  # PyG GATConv default negative_slope


def _fused_gat_kernel(x_ref, adj_ref,
                      w1_ref, a1s_ref, a1d_ref, b1_ref,
                      w2_ref, a2s_ref, a2d_ref, b2_ref,
                      out_ref, attn_ref):
    """Both GATConv layers (heads=1) + inter-layer ReLU, whole graph in VMEM.

    x_ref    : (N, F_in)
    adj_ref  : (N, N)        adj[i, j] = 1 iff edge j -> i (self-loops included)
    w*_ref   : (F_in, C)     GATConv.lin weight (bias=False)
    a*s_ref  : (1, C)        att_src as a row vector
    a*d_ref  : (C, 1)        att_dst as a column vector
    b*_ref   : (1, C)        GATConv bias
    out_ref  : (N, C_out)    final node features (after conv2)
    attn_ref : (N, N)        dense attention of conv1 only
    """
    # Additive softmax mask, computed ONCE and shared by both layers:
    # 0.0 on edges (and self loops), -1e9 elsewhere.
    neg_bias = (adj_ref[...] - 1.0) * _MASK_NEG                     # (N, N)

    def gat_conv(x, w_ref, asrc_ref, adst_ref, bias_ref, attn_out_ref):
        # Linear transform on the MXU: (N, F) @ (F, C).
        h = jnp.dot(x, w_ref[...], preferred_element_type=jnp.float32)          # (N, C)
        # Attention scores, both as MXU matmuls (no cross-lane reduces,
        # no 1-D intermediates):
        #   s_row[0, j] = <h_j, a_src>   (lane-major row)
        #   d_col[i, 0] = <h_i, a_dst>   (sublane-major column)
        s_row = lax.dot_general(asrc_ref[...], h, (((1,), (1,)), ((), ())),
                                preferred_element_type=jnp.float32)              # (1, N)
        d_col = jnp.dot(h, adst_ref[...], preferred_element_type=jnp.float32)    # (N, 1)

        # e[i, j] = LeakyReLU(d[i] + s[j]) masked to existing edges.
        e = d_col + s_row                                                        # (N, N)
        e = jnp.where(e > 0, e, _LEAKY_SLOPE * e)
        e = e + neg_bias
        # Row-wise softmax over incoming edges.  Masked entries underflow to ~0
        # after the -1e9 bias, so no second masking select is needed; the self
        # loop guarantees every row has at least one live entry.
        e = e - jnp.max(e, axis=1, keepdims=True)
        p = jnp.exp(e)
        alpha = p * pl.reciprocal(jnp.sum(p, axis=1, keepdims=True), approx=True)
        if attn_out_ref is not None:
            attn_out_ref[...] = alpha
        # Neighborhood aggregation on the MXU + bias.
        return jnp.dot(alpha, h, preferred_element_type=jnp.float32) + bias_ref[...]

    h1 = gat_conv(x_ref[...], w1_ref, a1s_ref, a1d_ref, b1_ref, attn_ref)
    h1 = jnp.maximum(h1, 0.0)                     # F.relu between the two convs
    # conv2's attention is discarded by the caller -> never materialized.
    out_ref[...] = gat_conv(h1, w2_ref, a2s_ref, a2d_ref, b2_ref, None)


def gat_layer_forward(x, adj, conv1, conv2):
    """Run the fused two-conv GAT forward.  Returns (attn_conv1, out)."""
    n = x.shape[0]
    out_ch = conv2["w"].shape[1]
    vmem = pl.BlockSpec(memory_space=pltpu.MemorySpace.VMEM)
    out, attn = pl.pallas_call(
        _fused_gat_kernel,
        out_shape=(jax.ShapeDtypeStruct((n, out_ch), jnp.float32),
                   jax.ShapeDtypeStruct((n, n), jnp.float32)),
        in_specs=[vmem] * 10,
        out_specs=(vmem, vmem),
        compiler_params=pltpu.CompilerParams(vmem_limit_bytes=32 * 1024 * 1024),
    )(x, adj,
      conv1["w"], conv1["a_src"], conv1["a_dst"], conv1["bias"],
      conv2["w"], conv2["a_src"], conv2["a_dst"], conv2["bias"])
    return attn, out


def _glorot(key, shape, fan_in, fan_out):
    limit = jnp.sqrt(6.0 / (fan_in + fan_out))
    return jax.random.uniform(key, shape, jnp.float32, -limit, limit)


class GATLayerPallas:
    """JAX/Pallas re-implementation of the PyTorch GATLayer.forward."""

    def __init__(self, in_channels, hidden_channels, out_channels, key=None):
        if key is None:
            key = jax.random.PRNGKey(0)

        def make_conv(k, f_in, f_out):
            k1, k2, k3 = jax.random.split(k, 3)
            return dict(
                w=_glorot(k1, (f_in, f_out), f_in, f_out),      # lin weight (bias=False)
                a_src=_glorot(k2, (1, f_out), f_out, 1),        # att_src (row vector)
                a_dst=_glorot(k3, (f_out, 1), f_out, 1),        # att_dst (column vector)
                bias=jnp.zeros((1, f_out), jnp.float32),
            )

        k1, k2 = jax.random.split(key)
        self.conv1 = make_conv(k1, in_channels, hidden_channels)
        self.conv2 = make_conv(k2, hidden_channels, out_channels)

    def __call__(self, x, edge_index, weights=None):
        # TODO(synk): `weights` (edge_attr) is ignored; it is None in the
        #             reference usage and GATConv here has edge_dim=None.
        n = x.shape[0]
        src, dst = edge_index[0], edge_index[1]
        # Dense adjacency with self loops: adj[i, j] = 1 iff edge j -> i.
        adj = jnp.zeros((n, n), jnp.float32).at[dst, src].set(1.0)
        adj = jnp.maximum(adj, jnp.eye(n, dtype=jnp.float32))
        attn, out = gat_layer_forward(x, adj, self.conv1, self.conv2)
        # Mirrors `return (att_tuple, x)` -- attn is the dense alpha of conv1.
        return attn, out


if __name__ == "__main__":
    key = jax.random.PRNGKey(0)
    k_x, k_e, k_p = jax.random.split(key, 3)

    num_nodes = 16
    in_channels = 8
    hidden_channels = 16
    out_channels = 4
    num_edges = 40

    x = jax.random.normal(k_x, (num_nodes, in_channels), jnp.float32)
    edge_index = jax.random.randint(k_e, (2, num_edges), 0, num_nodes, jnp.int32)

    model = GATLayerPallas(in_channels, hidden_channels, out_channels, key=k_p)
    attn, out = model(x, edge_index)
    jax.block_until_ready(out)
    jax.block_until_ready(attn)

    assert out.shape == (num_nodes, out_channels)
    assert attn.shape == (num_nodes, num_nodes)
    assert bool(jnp.all(jnp.isfinite(out))) and bool(jnp.all(jnp.isfinite(attn)))
    # Each attention row is a softmax over incoming edges (approx reciprocal).
    assert bool(jnp.allclose(jnp.sum(attn, axis=1), 1.0, atol=1e-2))
    print("KERNEL_OK")
</pallas_src>

<mosaic_0001>
module attributes {stable_mosaic.version = 11 : i64} {
  func.func @_fused_gat_kernel(%arg0: memref<16x8xf32, #tpu.memory_space<vmem>>, %arg1: memref<16x16xf32, #tpu.memory_space<vmem>>, %arg2: memref<8x16xf32, #tpu.memory_space<vmem>>, %arg3: memref<1x16xf32, #tpu.memory_space<vmem>>, %arg4: memref<16x1xf32, #tpu.memory_space<vmem>>, %arg5: memref<1x16xf32, #tpu.memory_space<vmem>>, %arg6: memref<16x4xf32, #tpu.memory_space<vmem>>, %arg7: memref<1x4xf32, #tpu.memory_space<vmem>>, %arg8: memref<4x1xf32, #tpu.memory_space<vmem>>, %arg9: memref<1x4xf32, #tpu.memory_space<vmem>>, %arg10: memref<16x4xf32, #tpu.memory_space<vmem>>, %arg11: memref<16x16xf32, #tpu.memory_space<vmem>>) attributes {dimension_semantics = [], scalar_prefetch = 0 : i64, scratch_operands = 0 : i64, tpu.core_type = #tpu.core_type<tc>} {
    %c0 = arith.constant 0 : index
    %c0_0 = arith.constant 0 : index
    %0 = vector.load %arg1[%c0, %c0_0] : memref<16x16xf32, #tpu.memory_space<vmem>>, vector<16x16xf32>
    %cst = arith.constant 1.000000e+00 : f32
    %1 = vector.broadcast %cst : f32 to vector<16x16xf32>
    %2 = arith.subf %0, %1 : vector<16x16xf32>
    %cst_1 = arith.constant 1.000000e+09 : f32
    %3 = vector.broadcast %cst_1 : f32 to vector<16x16xf32>
    %4 = arith.mulf %2, %3 : vector<16x16xf32>
    %c0_2 = arith.constant 0 : index
    %c0_3 = arith.constant 0 : index
    %5 = vector.load %arg0[%c0_2, %c0_3] : memref<16x8xf32, #tpu.memory_space<vmem>>, vector<16x8xf32>
    %c0_4 = arith.constant 0 : index
    %c0_5 = arith.constant 0 : index
    %6 = vector.load %arg2[%c0_4, %c0_5] : memref<8x16xf32, #tpu.memory_space<vmem>>, vector<8x16xf32>
    %cst_6 = arith.constant dense<0.000000e+00> : vector<16x16xf32>
    %7 = tpu.matmul %5, %6, %cst_6 {dimension_numbers = #tpu.dot_dimension_numbers<[1], [0], [0], [1], [0, 0, 1, 1], [], []>} : vector<16x8xf32>, vector<8x16xf32>, vector<16x16xf32> -> vector<16x16xf32>
    %c0_7 = arith.constant 0 : index
    %c0_8 = arith.constant 0 : index
    %8 = vector.load %arg3[%c0_7, %c0_8] : memref<1x16xf32, #tpu.memory_space<vmem>>, vector<1x16xf32>
    %cst_9 = arith.constant dense<0.000000e+00> : vector<1x16xf32>
    %9 = tpu.matmul %8, %7, %cst_9 {dimension_numbers = #tpu.dot_dimension_numbers<[1], [1], [0], [0], [0, 0, 1, 0], [], []>} : vector<1x16xf32>, vector<16x16xf32>, vector<1x16xf32> -> vector<1x16xf32>
    %c0_10 = arith.constant 0 : index
    %c0_11 = arith.constant 0 : index
    %10 = vector.load %arg4[%c0_10, %c0_11] : memref<16x1xf32, #tpu.memory_space<vmem>>, vector<16x1xf32>
    %cst_12 = arith.constant dense<0.000000e+00> : vector<16x1xf32>
    %11 = tpu.matmul %7, %10, %cst_12 {dimension_numbers = #tpu.dot_dimension_numbers<[1], [0], [0], [1], [0, 0, 1, 1], [], []>} : vector<16x16xf32>, vector<16x1xf32>, vector<16x1xf32> -> vector<16x1xf32>
    %12 = vector.broadcast %11 : vector<16x1xf32> to vector<16x16xf32>
    %13 = vector.broadcast %9 : vector<1x16xf32> to vector<16x16xf32>
    %14 = arith.addf %12, %13 : vector<16x16xf32>
    %cst_13 = arith.constant 0.000000e+00 : f32
    %15 = vector.broadcast %cst_13 : f32 to vector<16x16xf32>
    %16 = arith.cmpf ogt, %14, %15 : vector<16x16xf32>
    %cst_14 = arith.constant 2.000000e-01 : f32
    %17 = vector.broadcast %cst_14 : f32 to vector<16x16xf32>
    %18 = arith.mulf %17, %14 : vector<16x16xf32>
    %19 = arith.select %16, %14, %18 : vector<16x16xi1>, vector<16x16xf32>
    %20 = arith.addf %19, %4 : vector<16x16xf32>
    %cst_15 = arith.constant dense<0xFF800000> : vector<16xf32>
    %21 = vector.multi_reduction <maximumf>, %20, %cst_15 [1] : vector<16x16xf32> to vector<16xf32>
    %22 = vector.shape_cast %21 : vector<16xf32> to vector<16x1xf32>
    %23 = vector.broadcast %22 : vector<16x1xf32> to vector<16x16xf32>
    %24 = arith.subf %20, %23 : vector<16x16xf32>
    %25 = math.exp %24 : vector<16x16xf32>
    %cst_16 = arith.constant dense<0.000000e+00> : vector<16xf32>
    %26 = vector.multi_reduction <add>, %25, %cst_16 [1] : vector<16x16xf32> to vector<16xf32>
    %27 = vector.shape_cast %26 : vector<16xf32> to vector<16x1xf32>
    %28 = tpu.reciprocal %27 {approx = true} : vector<16x1xf32> -> vector<16x1xf32>
    %29 = vector.broadcast %28 : vector<16x1xf32> to vector<16x16xf32>
    %30 = arith.mulf %25, %29 : vector<16x16xf32>
    %c0_17 = arith.constant 0 : index
    %c0_18 = arith.constant 0 : index
    %31 = vector.load %arg11[%c0_17, %c0_18] : memref<16x16xf32, #tpu.memory_space<vmem>>, vector<16x16xf32>
    tpu.vector_store %arg11[%c0_17, %c0_18], %30 {strides = array<i32>} : memref<16x16xf32, #tpu.memory_space<vmem>>, vector<16x16xf32>,
    %cst_19 = arith.constant dense<0.000000e+00> : vector<16x16xf32>
    %32 = tpu.matmul %30, %7, %cst_19 {dimension_numbers = #tpu.dot_dimension_numbers<[1], [0], [0], [1], [0, 0, 1, 1], [], []>} : vector<16x16xf32>, vector<16x16xf32>, vector<16x16xf32> -> vector<16x16xf32>
    %c0_20 = arith.constant 0 : index
    %c0_21 = arith.constant 0 : index
    %33 = vector.load %arg5[%c0_20, %c0_21] : memref<1x16xf32, #tpu.memory_space<vmem>>, vector<1x16xf32>
    %34 = vector.broadcast %33 : vector<1x16xf32> to vector<16x16xf32>
    %35 = arith.addf %32, %34 : vector<16x16xf32>
    %cst_22 = arith.constant 0.000000e+00 : f32
    %36 = vector.broadcast %cst_22 : f32 to vector<16x16xf32>
    %37 = arith.maximumf %35, %36 : vector<16x16xf32>
    %c0_23 = arith.constant 0 : index
    %c0_24 = arith.constant 0 : index
    %38 = vector.load %arg6[%c0_23, %c0_24] : memref<16x4xf32, #tpu.memory_space<vmem>>, vector<16x4xf32>
    %cst_25 = arith.constant dense<0.000000e+00> : vector<16x4xf32>
    %39 = tpu.matmul %37, %38, %cst_25 {dimension_numbers = #tpu.dot_dimension_numbers<[1], [0], [0], [1], [0, 0, 1, 1], [], []>} : vector<16x16xf32>, vector<16x4xf32>, vector<16x4xf32> -> vector<16x4xf32>
    %c0_26 = arith.constant 0 : index
    %c0_27 = arith.constant 0 : index
    %40 = vector.load %arg7[%c0_26, %c0_27] : memref<1x4xf32, #tpu.memory_space<vmem>>, vector<1x4xf32>
    %cst_28 = arith.constant dense<0.000000e+00> : vector<1x16xf32>
    %41 = tpu.matmul %40, %39, %cst_28 {dimension_numbers = #tpu.dot_dimension_numbers<[1], [1], [0], [0], [0, 0, 1, 0], [], []>} : vector<1x4xf32>, vector<16x4xf32>, vector<1x16xf32> -> vector<1x16xf32>
    %c0_29 = arith.constant 0 : index
    %c0_30 = arith.constant 0 : index
    %42 = vector.load %arg8[%c0_29, %c0_30] : memref<4x1xf32, #tpu.memory_space<vmem>>, vector<4x1xf32>
    %cst_31 = arith.constant dense<0.000000e+00> : vector<16x1xf32>
    %43 = tpu.matmul %39, %42, %cst_31 {dimension_numbers = #tpu.dot_dimension_numbers<[1], [0], [0], [1], [0, 0, 1, 1], [], []>} : vector<16x4xf32>, vector<4x1xf32>, vector<16x1xf32> -> vector<16x1xf32>
    %44 = vector.broadcast %43 : vector<16x1xf32> to vector<16x16xf32>
    %45 = vector.broadcast %41 : vector<1x16xf32> to vector<16x16xf32>
    %46 = arith.addf %44, %45 : vector<16x16xf32>
    %cst_32 = arith.constant 0.000000e+00 : f32
    %47 = vector.broadcast %cst_32 : f32 to vector<16x16xf32>
    %48 = arith.cmpf ogt, %46, %47 : vector<16x16xf32>
    %cst_33 = arith.constant 2.000000e-01 : f32
    %49 = vector.broadcast %cst_33 : f32 to vector<16x16xf32>
    %50 = arith.mulf %49, %46 : vector<16x16xf32>
    %51 = arith.select %48, %46, %50 : vector<16x16xi1>, vector<16x16xf32>
    %52 = arith.addf %51, %4 : vector<16x16xf32>
    %cst_34 = arith.constant dense<0xFF800000> : vector<16xf32>
    %53 = vector.multi_reduction <maximumf>, %52, %cst_34 [1] : vector<16x16xf32> to vector<16xf32>
    %54 = vector.shape_cast %53 : vector<16xf32> to vector<16x1xf32>
    %55 = vector.broadcast %54 : vector<16x1xf32> to vector<16x16xf32>
    %56 = arith.subf %52, %55 : vector<16x16xf32>
    %57 = math.exp %56 : vector<16x16xf32>
    %cst_35 = arith.constant dense<0.000000e+00> : vector<16xf32>
    %58 = vector.multi_reduction <add>, %57, %cst_35 [1] : vector<16x16xf32> to vector<16xf32>
    %59 = vector.shape_cast %58 : vector<16xf32> to vector<16x1xf32>
    %60 = tpu.reciprocal %59 {approx = true} : vector<16x1xf32> -> vector<16x1xf32>
    %61 = vector.broadcast %60 : vector<16x1xf32> to vector<16x16xf32>
    %62 = arith.mulf %57, %61 : vector<16x16xf32>
    %cst_36 = arith.constant dense<0.000000e+00> : vector<16x4xf32>
    %63 = tpu.matmul %62, %39, %cst_36 {dimension_numbers = #tpu.dot_dimension_numbers<[1], [0], [0], [1], [0, 0, 1, 1], [], []>} : vector<16x16xf32>, vector<16x4xf32>, vector<16x4xf32> -> vector<16x4xf32>
    %c0_37 = arith.constant 0 : index
    %c0_38 = arith.constant 0 : index
    %64 = vector.load %arg9[%c0_37, %c0_38] : memref<1x4xf32, #tpu.memory_space<vmem>>, vector<1x4xf32>
    %65 = vector.broadcast %64 : vector<1x4xf32> to vector<16x4xf32>
    %66 = arith.addf %63, %65 : vector<16x4xf32>
    %c0_39 = arith.constant 0 : index
    %c0_40 = arith.constant 0 : index
    %67 = vector.load %arg10[%c0_39, %c0_40] : memref<16x4xf32, #tpu.memory_space<vmem>>, vector<16x4xf32>
    tpu.vector_store %arg10[%c0_39, %c0_40], %66 {strides = array<i32>} : memref<16x4xf32, #tpu.memory_space<vmem>>, vector<16x4xf32>,
    return
  }
}

</mosaic_0001>

<llo_original>
// kernel: tpu_custom_call.1
$region0: #{tpu_custom_call.1}
  #allocation0 [shape = 'u32[]', space=smem, size = 0x4, offset = 0x4, fixed_abs, tag = 'smem constant byte address 0x4 - core index']
  #allocation1 [shape = 'u32[72,128]{1,0:T(1,128)}', space=vmem, size = 0x9000, scoped, tag = 'internal scratch']
  %s0 = inlined_call_operand.vmem [shape: f32[16,8], index: 0, kind: input, shape index: {}]
  %s1 = inlined_call_operand.vmem [shape: f32[16,16], index: 1, kind: input, shape index: {}]
  %s2 = inlined_call_operand.vmem [shape: f32[8,16], index: 2, kind: input, shape index: {}]
  %s3 = inlined_call_operand.vmem [shape: f32[1,16], index: 3, kind: input, shape index: {}]
  %s4 = inlined_call_operand.vmem [shape: f32[16,1], index: 4, kind: input, shape index: {}]
  %s5 = inlined_call_operand.vmem [shape: f32[1,16], index: 5, kind: input, shape index: {}]
  %s6 = inlined_call_operand.vmem [shape: f32[16,4], index: 6, kind: input, shape index: {}]
  %s7 = inlined_call_operand.vmem [shape: f32[1,4], index: 7, kind: input, shape index: {}]
  %s8 = inlined_call_operand.vmem [shape: f32[4,1], index: 8, kind: input, shape index: {}]
  %s9 = inlined_call_operand.vmem [shape: f32[1,4], index: 9, kind: input, shape index: {}]
  %s10 = inlined_call_operand.vmem [shape: f32[16,4], index: 10, kind: output, shape index: {0}]
  %s11 = inlined_call_operand.hbm [shape: f32[16,16], index: 11, kind: output, shape index: {1}]
  %12 = xla_tuple %s10, %s11
  %s13 = sld [smem:[#allocation0]]
  $region58: #{tpu_custom_call.1} parent=0
    _
  %s15 = ssub.s32 1, %s13
  %s16 = scalar_select 0, %s15, %s13
  $region1: #{tpu_custom_call.1} parent=0
    #allocation2 [shape = 'u8[8192]{0}', space=vmem, size = 0x2000, scoped, tag = 'output window, operand 1, single buffered']
    #allocation3 [shape = 's32[1]{0}', space=sflag, size = 0x4, scoped, tag = 'scoped memory for tpu_custom_call.1']
    %17 = vsyncpa [#allocation3], 0
    // Predicated region
    $region2: #{tpu_custom_call.1} parent=1 // pred_check
      _
    $region3: #{tpu_custom_call.1} parent=1 // pred_check_branch
      %19 = sbr.rel (0) target = $region5
    $region4: #{tpu_custom_call.1} parent=1 // pred_region
      _
    $region5: #{tpu_custom_call.1} parent=1 // pred_fallthru
      _
    // Predicated region
    $region6: #{tpu_custom_call.1} parent=1 // pred_check
      _
    $region7: #{tpu_custom_call.1} parent=1 // pred_check_branch
      %21 = sbr.rel (0) target = $region9
    $region8: #{tpu_custom_call.1} parent=1 // pred_region
      _
    $region9: #{tpu_custom_call.1} parent=1 // pred_fallthru
      _
    // Predicated region
    $region10: #{tpu_custom_call.1} parent=1 // pred_check
      _
    $region11: #{tpu_custom_call.1} parent=1 // pred_check_branch
      %23 = sbr.rel (0) target = $region13
    $region12: #{tpu_custom_call.1} parent=1 // pred_region
      _
    $region13: #{tpu_custom_call.1} parent=1 // pred_fallthru
      _
    // Predicated region
    $region14: #{tpu_custom_call.1} parent=1 // pred_check
      _
    $region15: #{tpu_custom_call.1} parent=1 // pred_check_branch
      %25 = sbr.rel (0) target = $region17
    $region16: #{tpu_custom_call.1} parent=1 // pred_region
      _
    $region17: #{tpu_custom_call.1} parent=1 // pred_fallthru
      _
    // Predicated region
    $region18: #{tpu_custom_call.1} parent=1 // pred_check
      _
    $region19: #{tpu_custom_call.1} parent=1 // pred_check_branch
      %27 = sbr.rel (0) target = $region21
    $region20: #{tpu_custom_call.1} parent=1 // pred_region
      _
    $region21: #{tpu_custom_call.1} parent=1 // pred_fallthru
      _
    // Predicated region
    $region22: #{tpu_custom_call.1} parent=1 // pred_check
      _
    $region23: #{tpu_custom_call.1} parent=1 // pred_check_branch
      %29 = sbr.rel (0) target = $region25
    $region24: #{tpu_custom_call.1} parent=1 // pred_region
      _
    $region25: #{tpu_custom_call.1} parent=1 // pred_fallthru
      _
    // Predicated region
    $region26: #{tpu_custom_call.1} parent=1 // pred_check
      _
    $region27: #{tpu_custom_call.1} parent=1 // pred_check_branch
      %31 = sbr.rel (0) target = $region29
    $region28: #{tpu_custom_call.1} parent=1 // pred_region
      _
    $region29: #{tpu_custom_call.1} parent=1 // pred_fallthru
      _
    // Predicated region
    $region30: #{tpu_custom_call.1} parent=1 // pred_check
      _
    $region31: #{tpu_custom_call.1} parent=1 // pred_check_branch
      %33 = sbr.rel (0) target = $region33
    $region32: #{tpu_custom_call.1} parent=1 // pred_region
      _
    $region33: #{tpu_custom_call.1} parent=1 // pred_fallthru
      _
    // Predicated region
    $region34: #{tpu_custom_call.1} parent=1 // pred_check
      _
    $region35: #{tpu_custom_call.1} parent=1 // pred_check_branch
      %35 = sbr.rel (0) target = $region37
    $region36: #{tpu_custom_call.1} parent=1 // pred_region
      _
    $region37: #{tpu_custom_call.1} parent=1 // pred_fallthru
      _
    // Predicated region
    $region38: #{tpu_custom_call.1} parent=1 // pred_check
      _
    $region39: #{tpu_custom_call.1} parent=1 // pred_check_branch
      %37 = sbr.rel (0) target = $region41
    $region40: #{tpu_custom_call.1} parent=1 // pred_region
      _
    $region41: #{tpu_custom_call.1} parent=1 // pred_fallthru
      _
    %v38 = vld [vmem:[%s1] sm:$0xff]
    %v39 = vld [vmem:[%s1 + $0x8] sm:$0xff]
    %v40 = vsub.f32 %v38, 1.0
    %v41 = vsub.f32 %v39, 1.0
    %v42 = vmul.f32 %v40, 1e+09
    %v43 = vmul.f32 %v41, 1e+09
    %v44 = vld [vmem:[%s0] sm:$0xff]
    %v45 = vld [vmem:[%s0 + $0x8] sm:$0xff]
    %v46 = vld [vmem:[%s2] sm:$0xff]
    %vm47 = vcmask 64512
    %v49 = vsel %vm47, %v44, 0
    %v52 = vsel %vm47, %v45, 0
    %54 = vmatpush.msra.mxu0 0.0
    %55 = vmatpush.msra.mxu0 0.0
    %56 = vmatpush.msra.mxu0 0.0
    %57 = vmatpush.msra.mxu0 0.0
    %58 = vmatpush.msra.mxu0 0.0
    %59 = vmatpush.msra.mxu0 0.0
    %60 = vmatpush.msra.mxu0 0.0
    %61 = vmatpush.msra.mxu0 0.0
    %62 = vmatpush.msra.mxu0 0.0
    %63 = vmatpush.msra.mxu0 0.0
    %64 = vmatpush.msra.mxu0 0.0
    %65 = vmatpush.msra.mxu0 0.0
    %66 = vmatpush.msra.mxu0 0.0
    %67 = vmatpush.msra.mxu0 0.0
    %68 = vmatpush.msra.mxu0 0.0
    %69 = vmatpush.msra.mxu0 %v46
    %70 = vmatmul.f32.gmra.mxu0 %v49
    %v71 = vpop.f32.mrf.mxu0
    %v72 = vadd.f32 0.0, %v71
    %73 = vmatmul.f32.gmra.mxu0 %v52
    %v74 = vpop.f32.mrf.mxu0
    %v75 = vadd.f32 0.0, %v74
    %76 = vdwg.mxu0
    %v77 = vld [vmem:[%s3] sm:$0x1]
    %vm78 = vcmask 130048
    %v80 = vsel %vm78, %v77, 0
    %v83 = vsel %vm78, %v72, 0
    %v86 = vsel %vm78, %v75, 0
    %88 = vmatpush.xpose.msra.mxu0 0.0
    %89 = vmatpush.xpose.msra.mxu0 0.0
    %90 = vmatpush.xpose.msra.mxu0 0.0
    %91 = vmatpush.xpose.msra.mxu0 0.0
    %92 = vmatpush.xpose.msra.mxu0 0.0
    %93 = vmatpush.xpose.msra.mxu0 0.0
    %94 = vmatpush.xpose.msra.mxu0 0.0
    %95 = vmatpush.xpose.msra.mxu0 0.0
    %96 = vmatpush.xpose.msra.mxu0 0.0
    %97 = vmatpush.xpose.msra.mxu0 0.0
    %98 = vmatpush.xpose.msra.mxu0 0.0
    %99 = vmatpush.xpose.msra.mxu0 0.0
    %100 = vmatpush.xpose.msra.mxu0 0.0
    %101 = vmatpush.xpose.msra.mxu0 0.0
    %102 = vmatpush.xpose.msra.mxu0 %v86
    %103 = vmatpush.xpose.msra.mxu0 %v83
    %104 = vmatmul.f32.gmra.mxu0 %v80
    %v105 = vpop.f32.mrf.mxu0
    %v106 = vadd.f32 0.0, %v105
    %107 = vdwg.mxu0
    %v108 = vld [vmem:[%s4] sm:$0xff]
    %v109 = vld [vmem:[%s4 + $0x8] sm:$0xff]
    %110 = vmatpush.msra.mxu0 0.0
    %111 = vmatpush.msra.mxu0 0.0
    %112 = vmatpush.msra.mxu0 0.0
    %113 = vmatpush.msra.mxu0 0.0
    %114 = vmatpush.msra.mxu0 0.0
    %115 = vmatpush.msra.mxu0 0.0
    %116 = vmatpush.msra.mxu0 0.0
    %117 = vmatpush.msra.mxu0 0.0
    %118 = vmatpush.msra.mxu0 0.0
    %119 = vmatpush.msra.mxu0 0.0
    %120 = vmatpush.msra.mxu0 0.0
    %121 = vmatpush.msra.mxu0 0.0
    %122 = vmatpush.msra.mxu0 0.0
    %123 = vmatpush.msra.mxu0 0.0
    %124 = vmatpush.msra.mxu0 %v109
    %125 = vmatpush.msra.mxu0 %v108
    %126 = vmatmul.f32.gmra.mxu0 %v83
    %v127 = vpop.f32.mrf.mxu0
    %v128 = vadd.f32 0.0, %v127
    %129 = vmatmul.f32.gmra.mxu0 %v86
    %v130 = vpop.f32.mrf.mxu0
    %v131 = vadd.f32 0.0, %v130
    %132 = vdwg.mxu0
    %134 = vset.pattern.permute.xlu0 0
    %135 = vperm.xlu0 %134, %v128
    %v136 = vpop.permute.xlu0 %135
    %139 = vset.pattern.permute.xlu0 0
    %140 = vperm.xlu0 %139, %v131
    %v141 = vpop.permute.xlu0 %140
    %v143 = vperm.slane %v106, 0
    %v144 = vadd.f32 %v136, %v143
    %v145 = vadd.f32 %v141, %v143
    %vm146 = vcmp.gt.f32.partialorder %v144, 0.0
    %vm147 = vcmp.gt.f32.partialorder %v145, 0.0
    %v148 = vmul.f32 %v144, 0.2
    %v149 = vmul.f32 %v145, 0.2
    %v150 = vsel %vm146, %v144, %v148
    %v151 = vsel %vm147, %v145, %v149
    %v152 = vadd.f32 %v150, %v42
    %v153 = vadd.f32 %v151, %v43
    %v154 = vsel %vm78, %v152, -inf
    %155 = vmax.xlane.f32.xlu0 %v154
    %v156 = vpop.xlane.xlu0 %155
    %v157 = vsel %vm78, %v153, -inf
    %158 = vmax.xlane.f32.xlu0 %v157
    %v159 = vpop.xlane.xlu0 %158
    %v160 = vsub.f32 %v152, %v156
    %v161 = vsub.f32 %v153, %v159
    %v162 = vmul.f32 %v160, 1.442695
    %v163 = vpow.pop %v162
    %v164 = vmul.f32 %v161, 1.442695
    %v165 = vpow.pop %v164
    %v166 = vsel %vm78, %v163, 0.0
    %167 = vadd.xlane.f32.xlu0 %v166
    %v168 = vpop.xlane.xlu0 %167
    %v169 = vsel %vm78, %v165, 0.0
    %170 = vadd.xlane.f32.xlu0 %v169
    %v171 = vpop.xlane.xlu0 %170
    %v172 = vrcp.pop %v168
    %v173 = vrcp.pop %v171
    %v174 = vmul.f32 %v163, %v172
    %v175 = vmul.f32 %v165, %v173
    %176 = vst.msk [vmem:[#allocation2] sm:$0xff] %vm78, %v174
    %177 = vst.msk [vmem:[#allocation2 + $0x8] sm:$0xff] %vm78, %v175
    %v178 = vld [vmem:[%s5] sm:$0x1]
    %v180 = vperm.slane %v178, 0
    %v183 = vsel %vm78, %v174, 0
    %v186 = vsel %vm78, %v175, 0
    %188 = vmatpush.msra.mxu0 0.0
    %189 = vmatpush.msra.mxu0 0.0
    %190 = vmatpush.msra.mxu0 0.0
    %191 = vmatpush.msra.mxu0 0.0
    %192 = vmatpush.msra.mxu0 0.0
    %193 = vmatpush.msra.mxu0 0.0
    %194 = vmatpush.msra.mxu0 0.0
    %195 = vmatpush.msra.mxu0 0.0
    %196 = vmatpush.msra.mxu0 0.0
    %197 = vmatpush.msra.mxu0 0.0
    %198 = vmatpush.msra.mxu0 0.0
    %199 = vmatpush.msra.mxu0 0.0
    %200 = vmatpush.msra.mxu0 0.0
    %201 = vmatpush.msra.mxu0 0.0
    %202 = vmatpush.msra.mxu0 %v75
    %203 = vmatpush.msra.mxu0 %v72
    %204 = vmatmul.f32.gmra.mxu0 %v183
    %v205 = vpop.f32.mrf.mxu0
    %v206 = vadd.f32 %v180, %v205
    %207 = vmatmul.f32.gmra.mxu0 %v186
    %v208 = vpop.f32.mrf.mxu0
    %v209 = vadd.f32 %v180, %v208
    %210 = vdwg.mxu0
    %v211 = vmax.f32 %v206, 0.0
    %v212 = vmax.f32 %v209, 0.0
    %v213 = vld [vmem:[%s6] sm:$0xff]
    %v214 = vld [vmem:[%s6 + $0x8] sm:$0xff]
    %v216 = vsel %vm78, %v211, 0
    %v219 = vsel %vm78, %v212, 0
    %221 = vmatpush.msra.mxu0 0.0
    %222 = vmatpush.msra.mxu0 0.0
    %223 = vmatpush.msra.mxu0 0.0
    %224 = vmatpush.msra.mxu0 0.0
    %225 = vmatpush.msra.mxu0 0.0
    %226 = vmatpush.msra.mxu0 0.0
    %227 = vmatpush.msra.mxu0 0.0
    %228 = vmatpush.msra.mxu0 0.0
    %229 = vmatpush.msra.mxu0 0.0
    %230 = vmatpush.msra.mxu0 0.0
    %231 = vmatpush.msra.mxu0 0.0
    %232 = vmatpush.msra.mxu0 0.0
    %233 = vmatpush.msra.mxu0 0.0
    %234 = vmatpush.msra.mxu0 0.0
    %235 = vmatpush.msra.mxu0 %v214
    %236 = vmatpush.msra.mxu0 %v213
    %237 = vmatmul.f32.gmra.mxu0 %v216
    %v238 = vpop.f32.mrf.mxu0
    %v239 = vadd.f32 0.0, %v238
    %240 = vmatmul.f32.gmra.mxu0 %v219
    %v241 = vpop.f32.mrf.mxu0
    %v242 = vadd.f32 0.0, %v241
    %243 = vdwg.mxu0
    %v244 = vld [vmem:[%s7] sm:$0x1]
    %vm245 = vcmask 31744
    %v247 = vsel %vm245, %v244, 0
    %v250 = vsel %vm245, %v239, 0
    %v253 = vsel %vm245, %v242, 0
    %255 = vmatpush.xpose.msra.mxu0 0.0
    %256 = vmatpush.xpose.msra.mxu0 0.0
    %257 = vmatpush.xpose.msra.mxu0 0.0
    %258 = vmatpush.xpose.msra.mxu0 0.0
    %259 = vmatpush.xpose.msra.mxu0 0.0
    %260 = vmatpush.xpose.msra.mxu0 0.0
    %261 = vmatpush.xpose.msra.mxu0 0.0
    %262 = vmatpush.xpose.msra.mxu0 0.0
    %263 = vmatpush.xpose.msra.mxu0 0.0
    %264 = vmatpush.xpose.msra.mxu0 0.0
    %265 = vmatpush.xpose.msra.mxu0 0.0
    %266 = vmatpush.xpose.msra.mxu0 0.0
    %267 = vmatpush.xpose.msra.mxu0 0.0
    %268 = vmatpush.xpose.msra.mxu0 0.0
    %269 = vmatpush.xpose.msra.mxu0 %v253
    %270 = vmatpush.xpose.msra.mxu0 %v250
    %271 = vmatmul.f32.gmra.mxu0 %v247
    %v272 = vpop.f32.mrf.mxu0
    %v273 = vadd.f32 0.0, %v272
    %274 = vdwg.mxu0
    %v275 = vld [vmem:[%s8] sm:$0xf]
    %vm276 = vcmask 1043456
    %v278 = vsel %vm276, %v275, 0
    %280 = vmatpush.msra.mxu0 0.0
    %281 = vmatpush.msra.mxu0 0.0
    %282 = vmatpush.msra.mxu0 0.0
    %283 = vmatpush.msra.mxu0 0.0
    %284 = vmatpush.msra.mxu0 0.0
    %285 = vmatpush.msra.mxu0 0.0
    %286 = vmatpush.msra.mxu0 0.0
    %287 = vmatpush.msra.mxu0 0.0
    %288 = vmatpush.msra.mxu0 0.0
    %289 = vmatpush.msra.mxu0 0.0
    %290 = vmatpush.msra.mxu0 0.0
    %291 = vmatpush.msra.mxu0 0.0
    %292 = vmatpush.msra.mxu0 0.0
    %293 = vmatpush.msra.mxu0 0.0
    %294 = vmatpush.msra.mxu0 0.0
    %295 = vmatpush.msra.mxu0 %v278
    %296 = vmatmul.f32.gmra.mxu0 %v250
    %v297 = vpop.f32.mrf.mxu0
    %v298 = vadd.f32 0.0, %v297
    %299 = vmatmul.f32.gmra.mxu0 %v253
    %v300 = vpop.f32.mrf.mxu0
    %v301 = vadd.f32 0.0, %v300
    %302 = vdwg.mxu0
    %304 = vset.pattern.permute.xlu0 0
    %305 = vperm.xlu0 %304, %v298
    %v306 = vpop.permute.xlu0 %305
    %309 = vset.pattern.permute.xlu0 0
    %310 = vperm.xlu0 %309, %v301
    %v311 = vpop.permute.xlu0 %310
    %v313 = vperm.slane %v273, 0
    %v314 = vadd.f32 %v306, %v313
    %v315 = vadd.f32 %v311, %v313
    %vm316 = vcmp.gt.f32.partialorder %v314, 0.0
    %vm317 = vcmp.gt.f32.partialorder %v315, 0.0
    %v318 = vmul.f32 %v314, 0.2
    %v319 = vmul.f32 %v315, 0.2
    %v320 = vsel %vm316, %v314, %v318
    %v321 = vsel %vm317, %v315, %v319
    %v322 = vadd.f32 %v320, %v42
    %v323 = vadd.f32 %v321, %v43
    %v324 = vsel %vm78, %v322, -inf
    %325 = vmax.xlane.f32.xlu0 %v324
    %v326 = vpop.xlane.xlu0 %325
    %v327 = vsel %vm78, %v323, -inf
    %328 = vmax.xlane.f32.xlu0 %v327
    %v329 = vpop.xlane.xlu0 %328
    %v330 = vsub.f32 %v322, %v326
    %v331 = vsub.f32 %v323, %v329
    %v332 = vmul.f32 %v330, 1.442695
    %v333 = vpow.pop %v332
    %v334 = vmul.f32 %v331, 1.442695
    %v335 = vpow.pop %v334
    %v336 = vsel %vm78, %v333, 0.0
    %337 = vadd.xlane.f32.xlu0 %v336
    %v338 = vpop.xlane.xlu0 %337
    %v339 = vsel %vm78, %v335, 0.0
    %340 = vadd.xlane.f32.xlu0 %v339
    %v341 = vpop.xlane.xlu0 %340
    %v342 = vrcp.pop %v338
    %v343 = vrcp.pop %v341
    %v344 = vmul.f32 %v333, %v342
    %v345 = vmul.f32 %v335, %v343
    %v346 = vld [vmem:[%s9] sm:$0x1]
    %v348 = vperm.slane %v346, 0
    %v351 = vsel %vm78, %v344, 0
    %v354 = vsel %vm78, %v345, 0
    %356 = vmatpush.msra.mxu0 0.0
    %357 = vmatpush.msra.mxu0 0.0
    %358 = vmatpush.msra.mxu0 0.0
    %359 = vmatpush.msra.mxu0 0.0
    %360 = vmatpush.msra.mxu0 0.0
    %361 = vmatpush.msra.mxu0 0.0
    %362 = vmatpush.msra.mxu0 0.0
    %363 = vmatpush.msra.mxu0 0.0
    %364 = vmatpush.msra.mxu0 0.0
    %365 = vmatpush.msra.mxu0 0.0
    %366 = vmatpush.msra.mxu0 0.0
    %367 = vmatpush.msra.mxu0 0.0
    %368 = vmatpush.msra.mxu0 0.0
    %369 = vmatpush.msra.mxu0 0.0
    %370 = vmatpush.msra.mxu0 %v242
    %371 = vmatpush.msra.mxu0 %v239
    %372 = vmatmul.f32.gmra.mxu0 %v351
    %v373 = vpop.f32.mrf.mxu0
    %v374 = vadd.f32 %v348, %v373
    %375 = vmatmul.f32.gmra.mxu0 %v354
    %v376 = vpop.f32.mrf.mxu0
    %v377 = vadd.f32 %v348, %v376
    %378 = vdwg.mxu0
    %379 = vst.msk [vmem:[%s10] sm:$0xff] %vm245, %v374
    %380 = vst.msk [vmem:[%s10 + $0x8] sm:$0xff] %vm245, %v377
    // Predicated region
    $region42: #{tpu_custom_call.1} parent=1 // pred_check
      _
    $region43: #{tpu_custom_call.1} parent=1 // pred_check_branch
      %382 = sbr.rel (0) target = $region45
    $region44: #{tpu_custom_call.1} parent=1 // pred_region
      _
    $region45: #{tpu_custom_call.1} parent=1 // pred_fallthru
      _
    // Predicated region
    $region46: #{tpu_custom_call.1} parent=1 // pred_check
      _
    $region47: #{tpu_custom_call.1} parent=1 // pred_check_branch
      %384 = sbr.rel (0) target = $region49
    $region48: #{tpu_custom_call.1} parent=1 // pred_region
      %386 = vsyncadd [#allocation3], 0
      %s387 = sshll.u32 [#allocation2], 4
      %s388 = int_to_ptr.vmem [resolvable:$true] %s387
      %s389 = sshll.u32 %s11, 4
      %s390 = int_to_ptr.hbm [resolvable:$true] %s389
      %395 = dma.vmem_to_hbm [thread:$0]  %s388, 256, %s390, [#allocation3], 128, 128, 8
    $region49: #{tpu_custom_call.1} parent=1 // pred_fallthru
      _
    // Predicated region
    $region50: #{tpu_custom_call.1} parent=1 // pred_check
      _
    $region51: #{tpu_custom_call.1} parent=1 // pred_check_branch
      %397 = sbr.rel (0) target = $region53
    $region52: #{tpu_custom_call.1} parent=1 // pred_region
      _
    $region53: #{tpu_custom_call.1} parent=1 // pred_fallthru
      _
    // Predicated region
    $region54: #{tpu_custom_call.1} parent=1 // pred_check
      _
    $region55: #{tpu_custom_call.1} parent=1 // pred_check_branch
      %399 = sbr.rel (0) target = $region57
    $region56: #{tpu_custom_call.1} parent=1 // pred_region
      %401 = dma.done [#allocation3], 256
    $region57: #{tpu_custom_call.1} parent=1 // pred_fallthru
      _
    %402 = vsyncpa [#allocation3], 1

</llo_original>
